<compile_context>
chip_gen: v6e
topology: v6e:2x2x1
jax: 0.10.0
libtpu: 0.0.40
codegen_flags: <defaults>
</compile_context>

<pallas_src>
import math
import jax
import jax.numpy as jnp
from jax.experimental import pallas as pl
from jax.experimental.pallas import tpu as pltpu


def lstm_fused_kernel(x_ref, emb_ref, wih_ref, whh_ref, b_ref, out_ref):
    """Embedding gather + whole LSTM (all T steps) in one kernel invocation.

    x_ref   : (T*Bp, 1) int32  padded token ids, time-major then batch
    emb_ref : (V, E)    f32    embedding table
    wih_ref : (E, 4H)   f32    fused input->gate weights (PyTorch order i,f,g,o)
    whh_ref : (H, 4H)   f32    fused hidden->gate weights
    b_ref   : (1, 4H)   f32    combined bias b_ih + b_hh
    out_ref : (Bp, (T+1)*H)    lanes [t*H:(t+1)*H] = h_t, last H lanes = c_T
    """
    TBp = x_ref.shape[0]
    V, E = emb_ref.shape
    H4 = whh_ref.shape[1]
    H = H4 // 4
    Bp = out_ref.shape[0]
    T = TBp // Bp

    # ---- fused embedding gather: one-hot @ table on the MXU (exact) ----
    tok = x_ref[...]                                                  # (T*Bp, 1)
    onehot = (tok == jax.lax.broadcasted_iota(jnp.int32, (TBp, V), 1)
              ).astype(jnp.float32)                                   # (T*Bp, V)
    emb = jnp.dot(onehot, emb_ref[...],
                  preferred_element_type=jnp.float32)                 # (T*Bp, E)

    # ---- non-recurrent pre-phase: one wide input projection + bias ----
    gates_x = jnp.dot(emb, wih_ref[...],
                      preferred_element_type=jnp.float32) + b_ref[...]  # (T*Bp, 4H)

    whh = whh_ref[...]                                                # (H, 4H)

    # ---- full-width activation helpers, hoisted out of the serial loop ----
    # gate lane layout: [i | f | g | o], each H lanes.  tanh(x) = 2*sigmoid(2x)-1
    lane = jax.lax.broadcasted_iota(jnp.int32, (Bp, H4), 1)
    is_g = jnp.logical_and(lane >= 2 * H, lane < 3 * H)
    pre_scale = jnp.where(is_g, 2.0, 1.0).astype(jnp.float32)   # 2x on g lanes
    post_scale = pre_scale                                      # 2*s on g lanes
    post_shift = jnp.where(is_g, -1.0, 0.0).astype(jnp.float32)  # -1 on g lanes

    h = jnp.zeros((Bp, H), jnp.float32)
    c = jnp.zeros((Bp, H), jnp.float32)
    hs = []

    # ---- serial recurrence, fully unrolled (T is small and static) ----
    for t in range(T):
        g = gates_x[t * Bp:(t + 1) * Bp] + jnp.dot(
            h, whh, preferred_element_type=jnp.float32)         # (Bp, 4H)
        s = jax.nn.sigmoid(g * pre_scale)       # single full-width EUP pass
        act = s * post_scale + post_shift       # g lanes become tanh(g)
        i_g = act[:, 0 * H:1 * H]
        f_g = act[:, 1 * H:2 * H]
        g_g = act[:, 2 * H:3 * H]
        o_g = act[:, 3 * H:4 * H]
        c = f_g * c + i_g * g_g
        h = o_g * jnp.tanh(c)
        hs.append(h)

    # ---- single lane-dense writeback: [h_0 | h_1 | ... | h_{T-1} | c_T] ----
    out_ref[...] = jnp.concatenate(hs + [c], axis=1)


def pack_encoder_params(emb_table, w_ih, w_hh, b_ih, b_hh):
    """One-time parameter packing (hoisted out of the per-call path)."""
    emb_packed = jnp.asarray(emb_table, jnp.float32)                  # (V, E)
    wih_packed = jnp.asarray(w_ih, jnp.float32).T                     # (E, 4H)
    whh_packed = jnp.asarray(w_hh, jnp.float32).T                     # (H, 4H)
    H4 = w_ih.shape[0]
    b_packed = (jnp.asarray(b_ih, jnp.float32)
                + jnp.asarray(b_hh, jnp.float32)).reshape(1, H4)      # (1, 4H)
    return emb_packed, wih_packed, whh_packed, b_packed


def encoder_attention_forward(x, packed_params):
    """
    x             : (T, B) int32 indices
    packed_params : output of pack_encoder_params
    returns (encoder_states (T,B,H), hidden (1,B,H), cell (1,B,H))
    """
    emb_packed, wih_packed, whh_packed, b_packed = packed_params
    T, B = x.shape
    H = whh_packed.shape[0]

    # pad batch to a full 8-sublane tile (tiny int op; the float-side pad /
    # gather / reshape now lives inside the kernel)
    Bp = max(8, ((B + 7) // 8) * 8)
    xi = x.astype(jnp.int32)
    if Bp != B:
        xi = jnp.pad(xi, ((0, 0), (0, Bp - B)))
    x_col = xi.reshape(T * Bp, 1)                                     # (T*Bp, 1)

    vmem = pl.BlockSpec(memory_space=pltpu.MemorySpace.VMEM)
    slab = pl.pallas_call(
        lstm_fused_kernel,
        out_shape=jax.ShapeDtypeStruct((Bp, (T + 1) * H), jnp.float32),
        in_specs=[vmem, vmem, vmem, vmem, vmem],
        out_specs=vmem,
    )(x_col, emb_packed, wih_packed, whh_packed, b_packed)

    # slab[b, t*H:(t+1)*H] = h_t[b]; slab[b, T*H:] = c_T[b]
    states = slab[:B, :T * H].reshape(B, T, H).transpose(1, 0, 2)     # (T, B, H)
    hidden = states[T - 1][None]          # h_T == last encoder state (1 layer)
    cell = slab[:B, T * H:(T + 1) * H][None]                          # (1, B, H)
    return states, hidden, cell


def reference_forward(x, emb_table, w_ih, w_hh, b_ih, b_hh):
    """Pure-JAX reference (mirrors torch.nn.LSTM, batch_first=False)."""
    H = w_hh.shape[1]
    emb = jnp.take(emb_table, x, axis=0).astype(jnp.float32)   # (T, B, E)
    B = emb.shape[1]

    def step(carry, x_t):
        h, c = carry
        gates = x_t @ w_ih.T + b_ih + h @ w_hh.T + b_hh        # (B, 4H)
        i = jax.nn.sigmoid(gates[:, 0:H])
        f = jax.nn.sigmoid(gates[:, H:2 * H])
        g = jnp.tanh(gates[:, 2 * H:3 * H])
        o = jax.nn.sigmoid(gates[:, 3 * H:4 * H])
        c_new = f * c + i * g
        h_new = o * jnp.tanh(c_new)
        return (h_new, c_new), h_new

    h0 = jnp.zeros((B, H), jnp.float32)
    c0 = jnp.zeros((B, H), jnp.float32)
    (h_T, c_T), states = jax.lax.scan(step, (h0, c0), emb)
    return states, h_T[None], c_T[None]


if __name__ == "__main__":
    # small shapes consistent with the module
    T, B = 8, 2            # seq_len, batch
    V = 32                 # input vocab size (len(input_index))
    E = 16                 # embedding_size
    H = 32                 # hidden_size  (4H = 128 -> one vreg lane row)

    key = jax.random.PRNGKey(0)
    k_x, k_emb, k_wih, k_whh, k_bih, k_bhh = jax.random.split(key, 6)

    x = jax.random.randint(k_x, (T, B), 0, V, dtype=jnp.int32)

    bound = 1.0 / math.sqrt(H)
    emb_table = jax.random.normal(k_emb, (V, E), jnp.float32) * 0.1
    w_ih = jax.random.uniform(k_wih, (4 * H, E), jnp.float32, -bound, bound)
    w_hh = jax.random.uniform(k_whh, (4 * H, H), jnp.float32, -bound, bound)
    b_ih = jax.random.uniform(k_bih, (4 * H,), jnp.float32, -bound, bound)
    b_hh = jax.random.uniform(k_bhh, (4 * H,), jnp.float32, -bound, bound)

    # one-time parameter packing (hoisted out of the per-call path)
    packed = pack_encoder_params(emb_table, w_ih, w_hh, b_ih, b_hh)

    fwd = jax.jit(encoder_attention_forward)
    states, hidden, cell = fwd(x, packed)
    jax.block_until_ready((states, hidden, cell))

    # self-check against pure-JAX reference
    states_r, hidden_r, cell_r = reference_forward(
        x, emb_table, w_ih, w_hh, b_ih, b_hh)
    assert states.shape == (T, B, H)
    assert hidden.shape == (1, B, H) and cell.shape == (1, B, H)
    assert jnp.allclose(states, states_r, atol=3e-5)
    assert jnp.allclose(hidden, hidden_r, atol=3e-5)
    assert jnp.allclose(cell, cell_r, atol=3e-5)

    print("KERNEL_OK")
</pallas_src>

<mosaic_0001>
module attributes {stable_mosaic.version = 11 : i64} {
  func.func @lstm_fused_kernel(%arg0: memref<64x1xi32, #tpu.memory_space<vmem>>, %arg1: memref<32x16xf32, #tpu.memory_space<vmem>>, %arg2: memref<16x128xf32, #tpu.memory_space<vmem>>, %arg3: memref<32x128xf32, #tpu.memory_space<vmem>>, %arg4: memref<1x128xf32, #tpu.memory_space<vmem>>, %arg5: memref<8x288xf32, #tpu.memory_space<vmem>>) attributes {dimension_semantics = [], scalar_prefetch = 0 : i64, scratch_operands = 0 : i64, tpu.core_type = #tpu.core_type<tc>} {
    %c0 = arith.constant 0 : index
    %c0_0 = arith.constant 0 : index
    %0 = vector.load %arg0[%c0, %c0_0] : memref<64x1xi32, #tpu.memory_space<vmem>>, vector<64x1xi32>
    %1 = tpu.iota {dimensions = array<i32: 1>} : vector<64x32xi32>
    %2 = vector.broadcast %0 : vector<64x1xi32> to vector<64x32xi32>
    %3 = arith.cmpi eq, %2, %1 : vector<64x32xi32>
    %4 = arith.extui %3 : vector<64x32xi1> to vector<64x32xi32>
    %5 = arith.sitofp %4 : vector<64x32xi32> to vector<64x32xf32>
    %c0_1 = arith.constant 0 : index
    %c0_2 = arith.constant 0 : index
    %6 = vector.load %arg1[%c0_1, %c0_2] : memref<32x16xf32, #tpu.memory_space<vmem>>, vector<32x16xf32>
    %cst = arith.constant dense<0.000000e+00> : vector<64x16xf32>
    %7 = tpu.matmul %5, %6, %cst {dimension_numbers = #tpu.dot_dimension_numbers<[1], [0], [0], [1], [0, 0, 1, 1], [], []>} : vector<64x32xf32>, vector<32x16xf32>, vector<64x16xf32> -> vector<64x16xf32>
    %c0_3 = arith.constant 0 : index
    %c0_4 = arith.constant 0 : index
    %8 = vector.load %arg2[%c0_3, %c0_4] : memref<16x128xf32, #tpu.memory_space<vmem>>, vector<16x128xf32>
    %cst_5 = arith.constant dense<0.000000e+00> : vector<64x128xf32>
    %9 = tpu.matmul %7, %8, %cst_5 {dimension_numbers = #tpu.dot_dimension_numbers<[1], [0], [0], [1], [0, 0, 1, 1], [], []>} : vector<64x16xf32>, vector<16x128xf32>, vector<64x128xf32> -> vector<64x128xf32>
    %c0_6 = arith.constant 0 : index
    %c0_7 = arith.constant 0 : index
    %10 = vector.load %arg4[%c0_6, %c0_7] : memref<1x128xf32, #tpu.memory_space<vmem>>, vector<1x128xf32>
    %11 = vector.broadcast %10 : vector<1x128xf32> to vector<64x128xf32>
    %12 = arith.addf %9, %11 : vector<64x128xf32>
    %c0_8 = arith.constant 0 : index
    %c0_9 = arith.constant 0 : index
    %13 = vector.load %arg3[%c0_8, %c0_9] : memref<32x128xf32, #tpu.memory_space<vmem>>, vector<32x128xf32>
    %14 = tpu.iota {dimensions = array<i32: 1>} : vector<8x128xi32>
    %c64_i32 = arith.constant 64 : i32
    %15 = vector.broadcast %c64_i32 : i32 to vector<8x128xi32>
    %16 = arith.cmpi sge, %14, %15 : vector<8x128xi32>
    %c96_i32 = arith.constant 96 : i32
    %17 = vector.broadcast %c96_i32 : i32 to vector<8x128xi32>
    %18 = arith.cmpi slt, %14, %17 : vector<8x128xi32>
    %19 = arith.andi %16, %18 : vector<8x128xi1>
    %cst_10 = arith.constant 2.000000e+00 : f32
    %cst_11 = arith.constant 1.000000e+00 : f32
    %20 = vector.broadcast %cst_10 : f32 to vector<8x128xf32>
    %21 = vector.broadcast %cst_11 : f32 to vector<8x128xf32>
    %22 = arith.select %19, %20, %21 : vector<8x128xi1>, vector<8x128xf32>
    %cst_12 = arith.constant -1.000000e+00 : f32
    %cst_13 = arith.constant 0.000000e+00 : f32
    %23 = vector.broadcast %cst_12 : f32 to vector<8x128xf32>
    %24 = vector.broadcast %cst_13 : f32 to vector<8x128xf32>
    %25 = arith.select %19, %23, %24 : vector<8x128xi1>, vector<8x128xf32>
    %cst_14 = arith.constant 0.000000e+00 : f32
    %26 = vector.broadcast %cst_14 : f32 to vector<8x32xf32>
    %cst_15 = arith.constant 0.000000e+00 : f32
    %27 = vector.broadcast %cst_15 : f32 to vector<8x32xf32>
    %28 = vector.extract_strided_slice %12 {offsets = [0, 0], sizes = [8, 128], strides = [1, 1]} : vector<64x128xf32> to vector<8x128xf32>
    %cst_16 = arith.constant dense<0.000000e+00> : vector<8x128xf32>
    %29 = tpu.matmul %26, %13, %cst_16 {dimension_numbers = #tpu.dot_dimension_numbers<[1], [0], [0], [1], [0, 0, 1, 1], [], []>} : vector<8x32xf32>, vector<32x128xf32>, vector<8x128xf32> -> vector<8x128xf32>
    %30 = arith.addf %28, %29 : vector<8x128xf32>
    %31 = arith.mulf %30, %22 : vector<8x128xf32>
    %32 = arith.negf %31 : vector<8x128xf32>
    %33 = math.exp %32 : vector<8x128xf32>
    %cst_17 = arith.constant 1.000000e+00 : f32
    %34 = vector.broadcast %cst_17 : f32 to vector<8x128xf32>
    %35 = arith.addf %34, %33 : vector<8x128xf32>
    %36 = arith.divf %34, %35 : vector<8x128xf32>
    %37 = arith.mulf %36, %22 : vector<8x128xf32>
    %38 = arith.addf %37, %25 : vector<8x128xf32>
    %39 = vector.extract_strided_slice %38 {offsets = [0, 0], sizes = [8, 32], strides = [1, 1]} : vector<8x128xf32> to vector<8x32xf32>
    %40 = vector.extract_strided_slice %38 {offsets = [0, 32], sizes = [8, 32], strides = [1, 1]} : vector<8x128xf32> to vector<8x32xf32>
    %41 = vector.extract_strided_slice %38 {offsets = [0, 64], sizes = [8, 32], strides = [1, 1]} : vector<8x128xf32> to vector<8x32xf32>
    %42 = vector.extract_strided_slice %38 {offsets = [0, 96], sizes = [8, 32], strides = [1, 1]} : vector<8x128xf32> to vector<8x32xf32>
    %43 = arith.mulf %40, %27 : vector<8x32xf32>
    %44 = arith.mulf %39, %41 : vector<8x32xf32>
    %45 = arith.addf %43, %44 : vector<8x32xf32>
    %46 = math.tanh %45 : vector<8x32xf32>
    %47 = arith.mulf %42, %46 : vector<8x32xf32>
    %48 = vector.extract_strided_slice %12 {offsets = [8, 0], sizes = [8, 128], strides = [1, 1]} : vector<64x128xf32> to vector<8x128xf32>
    %cst_18 = arith.constant dense<0.000000e+00> : vector<8x128xf32>
    %49 = tpu.matmul %47, %13, %cst_18 {dimension_numbers = #tpu.dot_dimension_numbers<[1], [0], [0], [1], [0, 0, 1, 1], [], []>} : vector<8x32xf32>, vector<32x128xf32>, vector<8x128xf32> -> vector<8x128xf32>
    %50 = arith.addf %48, %49 : vector<8x128xf32>
    %51 = arith.mulf %50, %22 : vector<8x128xf32>
    %52 = arith.negf %51 : vector<8x128xf32>
    %53 = math.exp %52 : vector<8x128xf32>
    %cst_19 = arith.constant 1.000000e+00 : f32
    %54 = vector.broadcast %cst_19 : f32 to vector<8x128xf32>
    %55 = arith.addf %54, %53 : vector<8x128xf32>
    %56 = arith.divf %54, %55 : vector<8x128xf32>
    %57 = arith.mulf %56, %22 : vector<8x128xf32>
    %58 = arith.addf %57, %25 : vector<8x128xf32>
    %59 = vector.extract_strided_slice %58 {offsets = [0, 0], sizes = [8, 32], strides = [1, 1]} : vector<8x128xf32> to vector<8x32xf32>
    %60 = vector.extract_strided_slice %58 {offsets = [0, 32], sizes = [8, 32], strides = [1, 1]} : vector<8x128xf32> to vector<8x32xf32>
    %61 = vector.extract_strided_slice %58 {offsets = [0, 64], sizes = [8, 32], strides = [1, 1]} : vector<8x128xf32> to vector<8x32xf32>
    %62 = vector.extract_strided_slice %58 {offsets = [0, 96], sizes = [8, 32], strides = [1, 1]} : vector<8x128xf32> to vector<8x32xf32>
    %63 = arith.mulf %60, %45 : vector<8x32xf32>
    %64 = arith.mulf %59, %61 : vector<8x32xf32>
    %65 = arith.addf %63, %64 : vector<8x32xf32>
    %66 = math.tanh %65 : vector<8x32xf32>
    %67 = arith.mulf %62, %66 : vector<8x32xf32>
    %68 = vector.extract_strided_slice %12 {offsets = [16, 0], sizes = [8, 128], strides = [1, 1]} : vector<64x128xf32> to vector<8x128xf32>
    %cst_20 = arith.constant dense<0.000000e+00> : vector<8x128xf32>
    %69 = tpu.matmul %67, %13, %cst_20 {dimension_numbers = #tpu.dot_dimension_numbers<[1], [0], [0], [1], [0, 0, 1, 1], [], []>} : vector<8x32xf32>, vector<32x128xf32>, vector<8x128xf32> -> vector<8x128xf32>
    %70 = arith.addf %68, %69 : vector<8x128xf32>
    %71 = arith.mulf %70, %22 : vector<8x128xf32>
    %72 = arith.negf %71 : vector<8x128xf32>
    %73 = math.exp %72 : vector<8x128xf32>
    %cst_21 = arith.constant 1.000000e+00 : f32
    %74 = vector.broadcast %cst_21 : f32 to vector<8x128xf32>
    %75 = arith.addf %74, %73 : vector<8x128xf32>
    %76 = arith.divf %74, %75 : vector<8x128xf32>
    %77 = arith.mulf %76, %22 : vector<8x128xf32>
    %78 = arith.addf %77, %25 : vector<8x128xf32>
    %79 = vector.extract_strided_slice %78 {offsets = [0, 0], sizes = [8, 32], strides = [1, 1]} : vector<8x128xf32> to vector<8x32xf32>
    %80 = vector.extract_strided_slice %78 {offsets = [0, 32], sizes = [8, 32], strides = [1, 1]} : vector<8x128xf32> to vector<8x32xf32>
    %81 = vector.extract_strided_slice %78 {offsets = [0, 64], sizes = [8, 32], strides = [1, 1]} : vector<8x128xf32> to vector<8x32xf32>
    %82 = vector.extract_strided_slice %78 {offsets = [0, 96], sizes = [8, 32], strides = [1, 1]} : vector<8x128xf32> to vector<8x32xf32>
    %83 = arith.mulf %80, %65 : vector<8x32xf32>
    %84 = arith.mulf %79, %81 : vector<8x32xf32>
    %85 = arith.addf %83, %84 : vector<8x32xf32>
    %86 = math.tanh %85 : vector<8x32xf32>
    %87 = arith.mulf %82, %86 : vector<8x32xf32>
    %88 = vector.extract_strided_slice %12 {offsets = [24, 0], sizes = [8, 128], strides = [1, 1]} : vector<64x128xf32> to vector<8x128xf32>
    %cst_22 = arith.constant dense<0.000000e+00> : vector<8x128xf32>
    %89 = tpu.matmul %87, %13, %cst_22 {dimension_numbers = #tpu.dot_dimension_numbers<[1], [0], [0], [1], [0, 0, 1, 1], [], []>} : vector<8x32xf32>, vector<32x128xf32>, vector<8x128xf32> -> vector<8x128xf32>
    %90 = arith.addf %88, %89 : vector<8x128xf32>
    %91 = arith.mulf %90, %22 : vector<8x128xf32>
    %92 = arith.negf %91 : vector<8x128xf32>
    %93 = math.exp %92 : vector<8x128xf32>
    %cst_23 = arith.constant 1.000000e+00 : f32
    %94 = vector.broadcast %cst_23 : f32 to vector<8x128xf32>
    %95 = arith.addf %94, %93 : vector<8x128xf32>
    %96 = arith.divf %94, %95 : vector<8x128xf32>
    %97 = arith.mulf %96, %22 : vector<8x128xf32>
    %98 = arith.addf %97, %25 : vector<8x128xf32>
    %99 = vector.extract_strided_slice %98 {offsets = [0, 0], sizes = [8, 32], strides = [1, 1]} : vector<8x128xf32> to vector<8x32xf32>
    %100 = vector.extract_strided_slice %98 {offsets = [0, 32], sizes = [8, 32], strides = [1, 1]} : vector<8x128xf32> to vector<8x32xf32>
    %101 = vector.extract_strided_slice %98 {offsets = [0, 64], sizes = [8, 32], strides = [1, 1]} : vector<8x128xf32> to vector<8x32xf32>
    %102 = vector.extract_strided_slice %98 {offsets = [0, 96], sizes = [8, 32], strides = [1, 1]} : vector<8x128xf32> to vector<8x32xf32>
    %103 = arith.mulf %100, %85 : vector<8x32xf32>
    %104 = arith.mulf %99, %101 : vector<8x32xf32>
    %105 = arith.addf %103, %104 : vector<8x32xf32>
    %106 = math.tanh %105 : vector<8x32xf32>
    %107 = arith.mulf %102, %106 : vector<8x32xf32>
    %108 = vector.extract_strided_slice %12 {offsets = [32, 0], sizes = [8, 128], strides = [1, 1]} : vector<64x128xf32> to vector<8x128xf32>
    %cst_24 = arith.constant dense<0.000000e+00> : vector<8x128xf32>
    %109 = tpu.matmul %107, %13, %cst_24 {dimension_numbers = #tpu.dot_dimension_numbers<[1], [0], [0], [1], [0, 0, 1, 1], [], []>} : vector<8x32xf32>, vector<32x128xf32>, vector<8x128xf32> -> vector<8x128xf32>
    %110 = arith.addf %108, %109 : vector<8x128xf32>
    %111 = arith.mulf %110, %22 : vector<8x128xf32>
    %112 = arith.negf %111 : vector<8x128xf32>
    %113 = math.exp %112 : vector<8x128xf32>
    %cst_25 = arith.constant 1.000000e+00 : f32
    %114 = vector.broadcast %cst_25 : f32 to vector<8x128xf32>
    %115 = arith.addf %114, %113 : vector<8x128xf32>
    %116 = arith.divf %114, %115 : vector<8x128xf32>
    %117 = arith.mulf %116, %22 : vector<8x128xf32>
    %118 = arith.addf %117, %25 : vector<8x128xf32>
    %119 = vector.extract_strided_slice %118 {offsets = [0, 0], sizes = [8, 32], strides = [1, 1]} : vector<8x128xf32> to vector<8x32xf32>
    %120 = vector.extract_strided_slice %118 {offsets = [0, 32], sizes = [8, 32], strides = [1, 1]} : vector<8x128xf32> to vector<8x32xf32>
    %121 = vector.extract_strided_slice %118 {offsets = [0, 64], sizes = [8, 32], strides = [1, 1]} : vector<8x128xf32> to vector<8x32xf32>
    %122 = vector.extract_strided_slice %118 {offsets = [0, 96], sizes = [8, 32], strides = [1, 1]} : vector<8x128xf32> to vector<8x32xf32>
    %123 = arith.mulf %120, %105 : vector<8x32xf32>
    %124 = arith.mulf %119, %121 : vector<8x32xf32>
    %125 = arith.addf %123, %124 : vector<8x32xf32>
    %126 = math.tanh %125 : vector<8x32xf32>
    %127 = arith.mulf %122, %126 : vector<8x32xf32>
    %128 = vector.extract_strided_slice %12 {offsets = [40, 0], sizes = [8, 128], strides = [1, 1]} : vector<64x128xf32> to vector<8x128xf32>
    %cst_26 = arith.constant dense<0.000000e+00> : vector<8x128xf32>
    %129 = tpu.matmul %127, %13, %cst_26 {dimension_numbers = #tpu.dot_dimension_numbers<[1], [0], [0], [1], [0, 0, 1, 1], [], []>} : vector<8x32xf32>, vector<32x128xf32>, vector<8x128xf32> -> vector<8x128xf32>
    %130 = arith.addf %128, %129 : vector<8x128xf32>
    %131 = arith.mulf %130, %22 : vector<8x128xf32>
    %132 = arith.negf %131 : vector<8x128xf32>
    %133 = math.exp %132 : vector<8x128xf32>
    %cst_27 = arith.constant 1.000000e+00 : f32
    %134 = vector.broadcast %cst_27 : f32 to vector<8x128xf32>
    %135 = arith.addf %134, %133 : vector<8x128xf32>
    %136 = arith.divf %134, %135 : vector<8x128xf32>
    %137 = arith.mulf %136, %22 : vector<8x128xf32>
    %138 = arith.addf %137, %25 : vector<8x128xf32>
    %139 = vector.extract_strided_slice %138 {offsets = [0, 0], sizes = [8, 32], strides = [1, 1]} : vector<8x128xf32> to vector<8x32xf32>
    %140 = vector.extract_strided_slice %138 {offsets = [0, 32], sizes = [8, 32], strides = [1, 1]} : vector<8x128xf32> to vector<8x32xf32>
    %141 = vector.extract_strided_slice %138 {offsets = [0, 64], sizes = [8, 32], strides = [1, 1]} : vector<8x128xf32> to vector<8x32xf32>
    %142 = vector.extract_strided_slice %138 {offsets = [0, 96], sizes = [8, 32], strides = [1, 1]} : vector<8x128xf32> to vector<8x32xf32>
    %143 = arith.mulf %140, %125 : vector<8x32xf32>
    %144 = arith.mulf %139, %141 : vector<8x32xf32>
    %145 = arith.addf %143, %144 : vector<8x32xf32>
    %146 = math.tanh %145 : vector<8x32xf32>
    %147 = arith.mulf %142, %146 : vector<8x32xf32>
    %148 = vector.extract_strided_slice %12 {offsets = [48, 0], sizes = [8, 128], strides = [1, 1]} : vector<64x128xf32> to vector<8x128xf32>
    %cst_28 = arith.constant dense<0.000000e+00> : vector<8x128xf32>
    %149 = tpu.matmul %147, %13, %cst_28 {dimension_numbers = #tpu.dot_dimension_numbers<[1], [0], [0], [1], [0, 0, 1, 1], [], []>} : vector<8x32xf32>, vector<32x128xf32>, vector<8x128xf32> -> vector<8x128xf32>
    %150 = arith.addf %148, %149 : vector<8x128xf32>
    %151 = arith.mulf %150, %22 : vector<8x128xf32>
    %152 = arith.negf %151 : vector<8x128xf32>
    %153 = math.exp %152 : vector<8x128xf32>
    %cst_29 = arith.constant 1.000000e+00 : f32
    %154 = vector.broadcast %cst_29 : f32 to vector<8x128xf32>
    %155 = arith.addf %154, %153 : vector<8x128xf32>
    %156 = arith.divf %154, %155 : vector<8x128xf32>
    %157 = arith.mulf %156, %22 : vector<8x128xf32>
    %158 = arith.addf %157, %25 : vector<8x128xf32>
    %159 = vector.extract_strided_slice %158 {offsets = [0, 0], sizes = [8, 32], strides = [1, 1]} : vector<8x128xf32> to vector<8x32xf32>
    %160 = vector.extract_strided_slice %158 {offsets = [0, 32], sizes = [8, 32], strides = [1, 1]} : vector<8x128xf32> to vector<8x32xf32>
    %161 = vector.extract_strided_slice %158 {offsets = [0, 64], sizes = [8, 32], strides = [1, 1]} : vector<8x128xf32> to vector<8x32xf32>
    %162 = vector.extract_strided_slice %158 {offsets = [0, 96], sizes = [8, 32], strides = [1, 1]} : vector<8x128xf32> to vector<8x32xf32>
    %163 = arith.mulf %160, %145 : vector<8x32xf32>
    %164 = arith.mulf %159, %161 : vector<8x32xf32>
    %165 = arith.addf %163, %164 : vector<8x32xf32>
    %166 = math.tanh %165 : vector<8x32xf32>
    %167 = arith.mulf %162, %166 : vector<8x32xf32>
    %168 = vector.extract_strided_slice %12 {offsets = [56, 0], sizes = [8, 128], strides = [1, 1]} : vector<64x128xf32> to vector<8x128xf32>
    %cst_30 = arith.constant dense<0.000000e+00> : vector<8x128xf32>
    %169 = tpu.matmul %167, %13, %cst_30 {dimension_numbers = #tpu.dot_dimension_numbers<[1], [0], [0], [1], [0, 0, 1, 1], [], []>} : vector<8x32xf32>, vector<32x128xf32>, vector<8x128xf32> -> vector<8x128xf32>
    %170 = arith.addf %168, %169 : vector<8x128xf32>
    %171 = arith.mulf %170, %22 : vector<8x128xf32>
    %172 = arith.negf %171 : vector<8x128xf32>
    %173 = math.exp %172 : vector<8x128xf32>
    %cst_31 = arith.constant 1.000000e+00 : f32
    %174 = vector.broadcast %cst_31 : f32 to vector<8x128xf32>
    %175 = arith.addf %174, %173 : vector<8x128xf32>
    %176 = arith.divf %174, %175 : vector<8x128xf32>
    %177 = arith.mulf %176, %22 : vector<8x128xf32>
    %178 = arith.addf %177, %25 : vector<8x128xf32>
    %179 = vector.extract_strided_slice %178 {offsets = [0, 0], sizes = [8, 32], strides = [1, 1]} : vector<8x128xf32> to vector<8x32xf32>
    %180 = vector.extract_strided_slice %178 {offsets = [0, 32], sizes = [8, 32], strides = [1, 1]} : vector<8x128xf32> to vector<8x32xf32>
    %181 = vector.extract_strided_slice %178 {offsets = [0, 64], sizes = [8, 32], strides = [1, 1]} : vector<8x128xf32> to vector<8x32xf32>
    %182 = vector.extract_strided_slice %178 {offsets = [0, 96], sizes = [8, 32], strides = [1, 1]} : vector<8x128xf32> to vector<8x32xf32>
    %183 = arith.mulf %180, %165 : vector<8x32xf32>
    %184 = arith.mulf %179, %181 : vector<8x32xf32>
    %185 = arith.addf %183, %184 : vector<8x32xf32>
    %186 = math.tanh %185 : vector<8x32xf32>
    %187 = arith.mulf %182, %186 : vector<8x32xf32>
    %188 = tpu.concatenate %47, %67, %87, %107, %127, %147, %167, %187, %185 in 1 : vector<8x32xf32>, vector<8x32xf32>, vector<8x32xf32>, vector<8x32xf32>, vector<8x32xf32>, vector<8x32xf32>, vector<8x32xf32>, vector<8x32xf32>, vector<8x32xf32> -> vector<8x288xf32>
    %c0_32 = arith.constant 0 : index
    %c0_33 = arith.constant 0 : index
    %189 = vector.load %arg5[%c0_32, %c0_33] : memref<8x288xf32, #tpu.memory_space<vmem>>, vector<8x288xf32>
    tpu.vector_store %arg5[%c0_32, %c0_33], %188 {strides = array<i32>} : memref<8x288xf32, #tpu.memory_space<vmem>>, vector<8x288xf32>,
    return
  }
}

</mosaic_0001>

<llo_original>
// kernel: encoder_attention_forward.1
$region0: #{encoder_attention_forward.1}
  #allocation0 [shape = 'u32[]', space=smem, size = 0x4, offset = 0x4, fixed_abs, tag = 'smem constant byte address 0x4 - core index']
  #allocation1 [shape = 'u32[144,128]{1,0:T(1,128)}', space=vmem, size = 0x12000, scoped, tag = 'internal scratch']
  %s0 = inlined_call_operand.vmem [shape: s32[64,1], index: 0, kind: input, shape index: {}]
  %s1 = inlined_call_operand.vmem [shape: f32[32,16], index: 1, kind: input, shape index: {}]
  %s2 = inlined_call_operand.vmem [shape: f32[16,128], index: 2, kind: input, shape index: {}]
  %s3 = inlined_call_operand.vmem [shape: f32[32,128], index: 3, kind: input, shape index: {}]
  %s4 = inlined_call_operand.vmem [shape: f32[1,128], index: 4, kind: input, shape index: {}]
  %s5 = inlined_call_operand.vmem [shape: f32[8,288], index: 5, kind: output, shape index: {}]
  %s6 = sld [smem:[#allocation0]]
  $region30: #{encoder_attention_forward.1} parent=0
    _
  %s8 = ssub.s32 1, %s6
  %s9 = scalar_select 0, %s8, %s6
  // Predicated region
  $region2: #{encoder_attention_forward.1} parent=0 // pred_check
    _
  $region3: #{encoder_attention_forward.1} parent=0 // pred_check_branch
    %11 = sbr.rel (0) target = $region5
  $region4: #{encoder_attention_forward.1} parent=0 // pred_region
    _
  $region5: #{encoder_attention_forward.1} parent=0 // pred_fallthru
    _
  // Predicated region
  $region6: #{encoder_attention_forward.1} parent=0 // pred_check
    _
  $region7: #{encoder_attention_forward.1} parent=0 // pred_check_branch
    %13 = sbr.rel (0) target = $region9
  $region8: #{encoder_attention_forward.1} parent=0 // pred_region
    _
  $region9: #{encoder_attention_forward.1} parent=0 // pred_fallthru
    _
  // Predicated region
  $region10: #{encoder_attention_forward.1} parent=0 // pred_check
    _
  $region11: #{encoder_attention_forward.1} parent=0 // pred_check_branch
    %15 = sbr.rel (0) target = $region13
  $region12: #{encoder_attention_forward.1} parent=0 // pred_region
    _
  $region13: #{encoder_attention_forward.1} parent=0 // pred_fallthru
    _
  // Predicated region
  $region14: #{encoder_attention_forward.1} parent=0 // pred_check
    _
  $region15: #{encoder_attention_forward.1} parent=0 // pred_check_branch
    %17 = sbr.rel (0) target = $region17
  $region16: #{encoder_attention_forward.1} parent=0 // pred_region
    _
  $region17: #{encoder_attention_forward.1} parent=0 // pred_fallthru
    _
  // Predicated region
  $region18: #{encoder_attention_forward.1} parent=0 // pred_check
    _
  $region19: #{encoder_attention_forward.1} parent=0 // pred_check_branch
    %19 = sbr.rel (0) target = $region21
  $region20: #{encoder_attention_forward.1} parent=0 // pred_region
    _
  $region21: #{encoder_attention_forward.1} parent=0 // pred_fallthru
    _
  %v20 = vld [vmem:[%s0] sm:$0xff]
  %v21 = vld [vmem:[%s0 + $0x8] sm:$0xff]
  %v22 = vld [vmem:[%s0 + $0x10] sm:$0xff]
  %v23 = vld [vmem:[%s0 + $0x18] sm:$0xff]
  %v24 = vld [vmem:[%s0 + $0x20] sm:$0xff]
  %v25 = vld [vmem:[%s0 + $0x28] sm:$0xff]
  %v26 = vld [vmem:[%s0 + $0x30] sm:$0xff]
  %v27 = vld [vmem:[%s0 + $0x38] sm:$0xff]
  %v28 = vlaneseq
  %v29 = vand.u32 %v28, 127
  %30 = vset.pattern.permute.xlu0 0
  %31 = vperm.xlu0 %30, %v20
  %v32 = vpop.permute.xlu0 %31
  %33 = vset.pattern.permute.xlu0 0
  %34 = vperm.xlu0 %33, %v21
  %v35 = vpop.permute.xlu0 %34
  %36 = vset.pattern.permute.xlu0 0
  %37 = vperm.xlu0 %36, %v22
  %v38 = vpop.permute.xlu0 %37
  %39 = vset.pattern.permute.xlu0 0
  %40 = vperm.xlu0 %39, %v23
  %v41 = vpop.permute.xlu0 %40
  %42 = vset.pattern.permute.xlu0 0
  %43 = vperm.xlu0 %42, %v24
  %v44 = vpop.permute.xlu0 %43
  %45 = vset.pattern.permute.xlu0 0
  %46 = vperm.xlu0 %45, %v25
  %v47 = vpop.permute.xlu0 %46
  %48 = vset.pattern.permute.xlu0 0
  %49 = vperm.xlu0 %48, %v26
  %v50 = vpop.permute.xlu0 %49
  %51 = vset.pattern.permute.xlu0 0
  %52 = vperm.xlu0 %51, %v27
  %v53 = vpop.permute.xlu0 %52
  %vm54 = vcmp.eq.s32.totalorder %v32, %v29
  %vm55 = vcmp.eq.s32.totalorder %v35, %v29
  %vm56 = vcmp.eq.s32.totalorder %v38, %v29
  %vm57 = vcmp.eq.s32.totalorder %v41, %v29
  %vm58 = vcmp.eq.s32.totalorder %v44, %v29
  %vm59 = vcmp.eq.s32.totalorder %v47, %v29
  %vm60 = vcmp.eq.s32.totalorder %v50, %v29
  %vm61 = vcmp.eq.s32.totalorder %v53, %v29
  %v62 = vsel %vm54, 1, 0
  %v63 = vsel %vm55, 1, 0
  %v64 = vsel %vm56, 1, 0
  %v65 = vsel %vm57, 1, 0
  %v66 = vsel %vm58, 1, 0
  %v67 = vsel %vm59, 1, 0
  %v68 = vsel %vm60, 1, 0
  %v69 = vsel %vm61, 1, 0
  %v70 = vcvt.s32.f32 %v62
  %v71 = vcvt.s32.f32 %v63
  %v72 = vcvt.s32.f32 %v64
  %v73 = vcvt.s32.f32 %v65
  %v74 = vcvt.s32.f32 %v66
  %v75 = vcvt.s32.f32 %v67
  %v76 = vcvt.s32.f32 %v68
  %v77 = vcvt.s32.f32 %v69
  %v78 = vld [vmem:[%s1] sm:$0xff]
  %v79 = vld [vmem:[%s1 + $0x8] sm:$0xff]
  %v80 = vld [vmem:[%s1 + $0x10] sm:$0xff]
  %v81 = vld [vmem:[%s1 + $0x18] sm:$0xff]
  %vm82 = vcmask 261120
  %v84 = vsel %vm82, %v70, 0
  %v87 = vsel %vm82, %v71, 0
  %v90 = vsel %vm82, %v72, 0
  %v93 = vsel %vm82, %v73, 0
  %v96 = vsel %vm82, %v74, 0
  %v99 = vsel %vm82, %v75, 0
  %v102 = vsel %vm82, %v76, 0
  %v105 = vsel %vm82, %v77, 0
  %107 = vmatprep.subr.mxu0 0.0
  %108 = vmatpush1.msra.mxu0 0.0
  %109 = vmatprep.subr.mxu0 0.0
  %110 = vmatpush1.msra.mxu0 0.0
  %111 = vmatprep.subr.mxu0 0.0
  %112 = vmatpush1.msra.mxu0 0.0
  %113 = vmatprep.subr.mxu0 0.0
  %114 = vmatpush1.msra.mxu0 0.0
  %115 = vmatprep.subr.mxu0 0.0
  %116 = vmatpush1.msra.mxu0 0.0
  %117 = vmatprep.subr.mxu0 0.0
  %118 = vmatpush1.msra.mxu0 0.0
  %119 = vmatprep.subr.mxu0 0.0
  %120 = vmatpush1.msra.mxu0 0.0
  %121 = vmatprep.subr.mxu0 0.0
  %122 = vmatpush1.msra.mxu0 0.0
  %123 = vmatprep.subr.mxu0 0.0
  %124 = vmatpush1.msra.mxu0 0.0
  %125 = vmatprep.subr.mxu0 0.0
  %126 = vmatpush1.msra.mxu0 0.0
  %127 = vmatprep.subr.mxu0 0.0
  %128 = vmatpush1.msra.mxu0 0.0
  %129 = vmatprep.subr.mxu0 0.0
  %130 = vmatpush1.msra.mxu0 0.0
  %131 = vmatprep.subr.mxu0 0.0
  %132 = vmatpush1.msra.mxu0 %v81
  %133 = vmatprep.subr.mxu0 0.0
  %134 = vmatpush1.msra.mxu0 %v80
  %135 = vmatprep.subr.mxu0 0.0
  %136 = vmatpush1.msra.mxu0 %v79
  %137 = vmatprep.subr.mxu0 0.0
  %138 = vmatpush1.msra.mxu0 %v78
  %139 = vmatprep.subr.mxu0 0.0
  %140 = vmatpush2.msra.mxu0 0.0
  %141 = vmatprep.subr.mxu0 0.0
  %142 = vmatpush2.msra.mxu0 0.0
  %143 = vmatprep.subr.mxu0 0.0
  %144 = vmatpush2.msra.mxu0 0.0
  %145 = vmatprep.subr.mxu0 0.0
  %146 = vmatpush2.msra.mxu0 0.0
  %147 = vmatprep.subr.mxu0 0.0
  %148 = vmatpush2.msra.mxu0 0.0
  %149 = vmatprep.subr.mxu0 0.0
  %150 = vmatpush2.msra.mxu0 0.0
  %151 = vmatprep.subr.mxu0 0.0
  %152 = vmatpush2.msra.mxu0 0.0
  %153 = vmatprep.subr.mxu0 0.0
  %154 = vmatpush2.msra.mxu0 0.0
  %155 = vmatprep.subr.mxu0 0.0
  %156 = vmatpush2.msra.mxu0 0.0
  %157 = vmatprep.subr.mxu0 0.0
  %158 = vmatpush2.msra.mxu0 0.0
  %159 = vmatprep.subr.mxu0 0.0
  %160 = vmatpush2.msra.mxu0 0.0
  %161 = vmatprep.subr.mxu0 0.0
  %162 = vmatpush2.msra.mxu0 0.0
  %163 = vmatprep.subr.mxu0 0.0
  %164 = vmatpush2.msra.mxu0 0.0
  %165 = vmatprep.subr.mxu0 0.0
  %166 = vmatpush2.msra.mxu0 0.0
  %167 = vmatprep.subr.mxu0 0.0
  %168 = vmatpush2.msra.mxu0 0.0
  %169 = vmatprep.subr.mxu0 0.0
  %170 = vmatpush2.msra.mxu0 0.0
  %171 = vmatprep.mubr.f32.mxu0 0.0
  %172 = vmatmul.mubr.f32.gmra.mxu0 %v84
  %v173 = vpop.f32.mrf.mxu0
  %v174 = vadd.f32 0.0, %v173
  %v175 = vpop.f32.mrf.mxu0
  %176 = vmatprep.mubr.f32.mxu0 0.0
  %177 = vmatmul.mubr.f32.gmra.mxu0 %v87
  %v178 = vpop.f32.mrf.mxu0
  %v179 = vadd.f32 0.0, %v178
  %v180 = vpop.f32.mrf.mxu0
  %181 = vmatprep.mubr.f32.mxu0 0.0
  %182 = vmatmul.mubr.f32.gmra.mxu0 %v90
  %v183 = vpop.f32.mrf.mxu0
  %v184 = vadd.f32 0.0, %v183
  %v185 = vpop.f32.mrf.mxu0
  %186 = vmatprep.mubr.f32.mxu0 0.0
  %187 = vmatmul.mubr.f32.gmra.mxu0 %v93
  %v188 = vpop.f32.mrf.mxu0
  %v189 = vadd.f32 0.0, %v188
  %v190 = vpop.f32.mrf.mxu0
  %191 = vmatprep.mubr.f32.mxu0 0.0
  %192 = vmatmul.mubr.f32.gmra.mxu0 %v96
  %v193 = vpop.f32.mrf.mxu0
  %v194 = vadd.f32 0.0, %v193
  %v195 = vpop.f32.mrf.mxu0
  %196 = vmatprep.mubr.f32.mxu0 0.0
  %197 = vmatmul.mubr.f32.gmra.mxu0 %v99
  %v198 = vpop.f32.mrf.mxu0
  %v199 = vadd.f32 0.0, %v198
  %v200 = vpop.f32.mrf.mxu0
  %201 = vmatprep.mubr.f32.mxu0 0.0
  %202 = vmatmul.mubr.f32.gmra.mxu0 %v102
  %v203 = vpop.f32.mrf.mxu0
  %v204 = vadd.f32 0.0, %v203
  %v205 = vpop.f32.mrf.mxu0
  %206 = vmatprep.mubr.f32.mxu0 0.0
  %207 = vmatmul.mubr.f32.gmra.mxu0 %v105
  %v208 = vpop.f32.mrf.mxu0
  %v209 = vadd.f32 0.0, %v208
  %v210 = vpop.f32.mrf.mxu0
  %211 = vdwg.mxu0
  %v212 = vld [vmem:[%s2] sm:$0xff]
  %v213 = vld [vmem:[%s2 + $0x8] sm:$0xff]
  %v214 = vld [vmem:[%s4] sm:$0x1]
  %v216 = vlaneseq
  %v217 = vshrl.u32 %v216, 7
  %v218 = vsub.s32 0, %v217
  %v219 = vrot.slane %v214, %v218
  %vm221 = vcmask 130048
  %v223 = vsel %vm221, %v174, 0
  %v226 = vsel %vm221, %v179, 0
  %v229 = vsel %vm221, %v184, 0
  %v232 = vsel %vm221, %v189, 0
  %v235 = vsel %vm221, %v194, 0
  %v238 = vsel %vm221, %v199, 0
  %v241 = vsel %vm221, %v204, 0
  %v244 = vsel %vm221, %v209, 0
  %246 = vmatprep.subr.mxu0 0.0
  %247 = vmatpush1.msra.mxu0 0.0
  %248 = vmatprep.subr.mxu0 0.0
  %249 = vmatpush1.msra.mxu0 0.0
  %250 = vmatprep.subr.mxu0 0.0
  %251 = vmatpush1.msra.mxu0 0.0
  %252 = vmatprep.subr.mxu0 0.0
  %253 = vmatpush1.msra.mxu0 0.0
  %254 = vmatprep.subr.mxu0 0.0
  %255 = vmatpush1.msra.mxu0 0.0
  %256 = vmatprep.subr.mxu0 0.0
  %257 = vmatpush1.msra.mxu0 0.0
  %258 = vmatprep.subr.mxu0 0.0
  %259 = vmatpush1.msra.mxu0 0.0
  %260 = vmatprep.subr.mxu0 0.0
  %261 = vmatpush1.msra.mxu0 0.0
  %262 = vmatprep.subr.mxu0 0.0
  %263 = vmatpush1.msra.mxu0 0.0
  %264 = vmatprep.subr.mxu0 0.0
  %265 = vmatpush1.msra.mxu0 0.0
  %266 = vmatprep.subr.mxu0 0.0
  %267 = vmatpush1.msra.mxu0 0.0
  %268 = vmatprep.subr.mxu0 0.0
  %269 = vmatpush1.msra.mxu0 0.0
  %270 = vmatprep.subr.mxu0 0.0
  %271 = vmatpush1.msra.mxu0 0.0
  %272 = vmatprep.subr.mxu0 0.0
  %273 = vmatpush1.msra.mxu0 0.0
  %274 = vmatprep.subr.mxu0 0.0
  %275 = vmatpush1.msra.mxu0 %v213
  %276 = vmatprep.subr.mxu0 0.0
  %277 = vmatpush1.msra.mxu0 %v212
  %278 = vmatprep.subr.mxu0 0.0
  %279 = vmatpush2.msra.mxu0 0.0
  %280 = vmatprep.subr.mxu0 0.0
  %281 = vmatpush2.msra.mxu0 0.0
  %282 = vmatprep.subr.mxu0 0.0
  %283 = vmatpush2.msra.mxu0 0.0
  %284 = vmatprep.subr.mxu0 0.0
  %285 = vmatpush2.msra.mxu0 0.0
  %286 = vmatprep.subr.mxu0 0.0
  %287 = vmatpush2.msra.mxu0 0.0
  %288 = vmatprep.subr.mxu0 0.0
  %289 = vmatpush2.msra.mxu0 0.0
  %290 = vmatprep.subr.mxu0 0.0
  %291 = vmatpush2.msra.mxu0 0.0
  %292 = vmatprep.subr.mxu0 0.0
  %293 = vmatpush2.msra.mxu0 0.0
  %294 = vmatprep.subr.mxu0 0.0
  %295 = vmatpush2.msra.mxu0 0.0
  %296 = vmatprep.subr.mxu0 0.0
  %297 = vmatpush2.msra.mxu0 0.0
  %298 = vmatprep.subr.mxu0 0.0
  %299 = vmatpush2.msra.mxu0 0.0
  %300 = vmatprep.subr.mxu0 0.0
  %301 = vmatpush2.msra.mxu0 0.0
  %302 = vmatprep.subr.mxu0 0.0
  %303 = vmatpush2.msra.mxu0 0.0
  %304 = vmatprep.subr.mxu0 0.0
  %305 = vmatpush2.msra.mxu0 0.0
  %306 = vmatprep.subr.mxu0 0.0
  %307 = vmatpush2.msra.mxu0 0.0
  %308 = vmatprep.subr.mxu0 0.0
  %309 = vmatpush2.msra.mxu0 0.0
  %310 = vmatprep.mubr.f32.mxu0 0.0
  %311 = vmatmul.mubr.f32.gmra.mxu0 %v223
  %v312 = vpop.f32.mrf.mxu0
  %v313 = vadd.f32 %v219, %v312
  %v314 = vpop.f32.mrf.mxu0
  %315 = vmatprep.mubr.f32.mxu0 0.0
  %316 = vmatmul.mubr.f32.gmra.mxu0 %v226
  %v317 = vpop.f32.mrf.mxu0
  %v318 = vadd.f32 %v219, %v317
  %v319 = vpop.f32.mrf.mxu0
  %320 = vmatprep.mubr.f32.mxu0 0.0
  %321 = vmatmul.mubr.f32.gmra.mxu0 %v229
  %v322 = vpop.f32.mrf.mxu0
  %v323 = vadd.f32 %v219, %v322
  %v324 = vpop.f32.mrf.mxu0
  %325 = vmatprep.mubr.f32.mxu0 0.0
  %326 = vmatmul.mubr.f32.gmra.mxu0 %v232
  %v327 = vpop.f32.mrf.mxu0
  %v328 = vadd.f32 %v219, %v327
  %v329 = vpop.f32.mrf.mxu0
  %330 = vmatprep.mubr.f32.mxu0 0.0
  %331 = vmatmul.mubr.f32.gmra.mxu0 %v235
  %v332 = vpop.f32.mrf.mxu0
  %v333 = vadd.f32 %v219, %v332
  %v334 = vpop.f32.mrf.mxu0
  %335 = vmatprep.mubr.f32.mxu0 0.0
  %336 = vmatmul.mubr.f32.gmra.mxu0 %v238
  %v337 = vpop.f32.mrf.mxu0
  %v338 = vadd.f32 %v219, %v337
  %v339 = vpop.f32.mrf.mxu0
  %340 = vmatprep.mubr.f32.mxu0 0.0
  %341 = vmatmul.mubr.f32.gmra.mxu0 %v241
  %v342 = vpop.f32.mrf.mxu0
  %v343 = vadd.f32 %v219, %v342
  %v344 = vpop.f32.mrf.mxu0
  %345 = vmatprep.mubr.f32.mxu0 0.0
  %346 = vmatmul.mubr.f32.gmra.mxu0 %v244
  %v347 = vpop.f32.mrf.mxu0
  %v348 = vadd.f32 %v219, %v347
  %v349 = vpop.f32.mrf.mxu0
  %350 = vdwg.mxu0
  %v351 = vld [vmem:[%s3] sm:$0xff]
  %v352 = vld [vmem:[%s3 + $0x8] sm:$0xff]
  %v353 = vld [vmem:[%s3 + $0x10] sm:$0xff]
  %v354 = vld [vmem:[%s3 + $0x18] sm:$0xff]
  %vm355 = vcmp.ge.s32.totalorder %v29, 64
  %vm356 = vcmp.lt.s32.totalorder %v29, 96
  %vm357 = vmand %vm355, %vm356
  %v358 = vsel %vm357, 2.0, 1.0
  %v359 = vsel %vm357, -1.0, 0.0
  %v361 = vsel %vm82, 0.0, 0
  %363 = vmatprep.subr.mxu0 0.0
  %364 = vmatpush1.msra.mxu0 0.0
  %365 = vmatprep.subr.mxu0 0.0
  %366 = vmatpush1.msra.mxu0 0.0
  %367 = vmatprep.subr.mxu0 0.0
  %368 = vmatpush1.msra.mxu0 0.0
  %369 = vmatprep.subr.mxu0 0.0
  %370 = vmatpush1.msra.mxu0 0.0
  %371 = vmatprep.subr.mxu0 0.0
  %372 = vmatpush1.msra.mxu0 0.0
  %373 = vmatprep.subr.mxu0 0.0
  %374 = vmatpush1.msra.mxu0 0.0
  %375 = vmatprep.subr.mxu0 0.0
  %376 = vmatpush1.msra.mxu0 0.0
  %377 = vmatprep.subr.mxu0 0.0
  %378 = vmatpush1.msra.mxu0 0.0
  %379 = vmatprep.subr.mxu0 0.0
  %380 = vmatpush1.msra.mxu0 0.0
  %381 = vmatprep.subr.mxu0 0.0
  %382 = vmatpush1.msra.mxu0 0.0
  %383 = vmatprep.subr.mxu0 0.0
  %384 = vmatpush1.msra.mxu0 0.0
  %385 = vmatprep.subr.mxu0 0.0
  %386 = vmatpush1.msra.mxu0 0.0
  %387 = vmatprep.subr.mxu0 0.0
  %388 = vmatpush1.msra.mxu0 %v354
  %389 = vmatprep.subr.mxu0 0.0
  %390 = vmatpush1.msra.mxu0 %v353
  %391 = vmatprep.subr.mxu0 0.0
  %392 = vmatpush1.msra.mxu0 %v352
  %393 = vmatprep.subr.mxu0 0.0
  %394 = vmatpush1.msra.mxu0 %v351
  %395 = vmatprep.subr.mxu0 0.0
  %396 = vmatpush2.msra.mxu0 0.0
  %397 = vmatprep.subr.mxu0 0.0
  %398 = vmatpush2.msra.mxu0 0.0
  %399 = vmatprep.subr.mxu0 0.0
  %400 = vmatpush2.msra.mxu0 0.0
  %401 = vmatprep.subr.mxu0 0.0
  %402 = vmatpush2.msra.mxu0 0.0
  %403 = vmatprep.subr.mxu0 0.0
  %404 = vmatpush2.msra.mxu0 0.0
  %405 = vmatprep.subr.mxu0 0.0
  %406 = vmatpush2.msra.mxu0 0.0
  %407 = vmatprep.subr.mxu0 0.0
  %408 = vmatpush2.msra.mxu0 0.0
  %409 = vmatprep.subr.mxu0 0.0
  %410 = vmatpush2.msra.mxu0 0.0
  %411 = vmatprep.subr.mxu0 0.0
  %412 = vmatpush2.msra.mxu0 0.0
  %413 = vmatprep.subr.mxu0 0.0
  %414 = vmatpush2.msra.mxu0 0.0
  %415 = vmatprep.subr.mxu0 0.0
  %416 = vmatpush2.msra.mxu0 0.0
  %417 = vmatprep.subr.mxu0 0.0
  %418 = vmatpush2.msra.mxu0 0.0
  %419 = vmatprep.subr.mxu0 0.0
  %420 = vmatpush2.msra.mxu0 0.0
  %421 = vmatprep.subr.mxu0 0.0
  %422 = vmatpush2.msra.mxu0 0.0
  %423 = vmatprep.subr.mxu0 0.0
  %424 = vmatpush2.msra.mxu0 0.0
  %425 = vmatprep.subr.mxu0 0.0
  %426 = vmatpush2.msra.mxu0 0.0
  %427 = vmatprep.mubr.f32.mxu0 0.0
  %428 = vmatmul.mubr.f32.gmra.mxu0 %v361
  %v429 = vpop.f32.mrf.mxu0
  %v430 = vadd.f32 0.0, %v429
  %v431 = vpop.f32.mrf.mxu0
  %432 = vdwg.mxu0
  %v433 = vadd.f32 %v313, %v430
  %v434 = vmul.f32 %v433, %v358
  %v435 = vxor.u32 %v434, 2147483648
  %v436 = vmul.f32 %v435, 1.442695
  %v437 = vpow.pop %v436
  %v438 = vadd.f32 %v437, 1.0
  %v439 = vrcp.pop %v438
  %v440 = vmul.f32 1.0, %v439
  %v441 = vmul.f32 %v440, %v358
  %v442 = vadd.f32 %v441, %v359
  %v443 = vmul.f32 %v442, 0.0
  %445 = vrot.lane.b32.xlu0 %v442, 64
  %v446 = vpop.permute.xlu0 %445
  %v448 = vmul.f32 %v442, %v446
  %450 = vrot.lane.b32.xlu0 %v448, 32
  %v451 = vpop.permute.xlu0 %450
  %v453 = vadd.f32 %v443, %v451
  %v454 = vtanh.pop %v453
  %456 = vrot.lane.b32.xlu0 %v454, 64
  %v457 = vpop.permute.xlu0 %456
  %v459 = vmul.f32 %v442, %v457
  %461 = vrot.lane.b32.xlu0 %v459, 32
  %v462 = vpop.permute.xlu0 %461
  %v463 = vsel %vm82, %v462, 0
  %465 = vmatprep.subr.mxu0 0.0
  %466 = vmatpush1.msra.mxu0 0.0
  %467 = vmatprep.subr.mxu0 0.0
  %468 = vmatpush1.msra.mxu0 0.0
  %469 = vmatprep.subr.mxu0 0.0
  %470 = vmatpush1.msra.mxu0 0.0
  %471 = vmatprep.subr.mxu0 0.0
  %472 = vmatpush1.msra.mxu0 0.0
  %473 = vmatprep.subr.mxu0 0.0
  %474 = vmatpush1.msra.mxu0 0.0
  %475 = vmatprep.subr.mxu0 0.0
  %476 = vmatpush1.msra.mxu0 0.0
  %477 = vmatprep.subr.mxu0 0.0
  %478 = vmatpush1.msra.mxu0 0.0
  %479 = vmatprep.subr.mxu0 0.0
  %480 = vmatpush1.msra.mxu0 0.0
  %481 = vmatprep.subr.mxu0 0.0
  %482 = vmatpush1.msra.mxu0 0.0
  %483 = vmatprep.subr.mxu0 0.0
  %484 = vmatpush1.msra.mxu0 0.0
  %485 = vmatprep.subr.mxu0 0.0
  %486 = vmatpush1.msra.mxu0 0.0
  %487 = vmatprep.subr.mxu0 0.0
  %488 = vmatpush1.msra.mxu0 0.0
  %489 = vmatprep.subr.mxu0 0.0
  %490 = vmatpush1.msra.mxu0 %v354
  %491 = vmatprep.subr.mxu0 0.0
  %492 = vmatpush1.msra.mxu0 %v353
  %493 = vmatprep.subr.mxu0 0.0
  %494 = vmatpush1.msra.mxu0 %v352
  %495 = vmatprep.subr.mxu0 0.0
  %496 = vmatpush1.msra.mxu0 %v351
  %497 = vmatprep.subr.mxu0 0.0
  %498 = vmatpush2.msra.mxu0 0.0
  %499 = vmatprep.subr.mxu0 0.0
  %500 = vmatpush2.msra.mxu0 0.0
  %501 = vmatprep.subr.mxu0 0.0
  %502 = vmatpush2.msra.mxu0 0.0
  %503 = vmatprep.subr.mxu0 0.0
  %504 = vmatpush2.msra.mxu0 0.0
  %505 = vmatprep.subr.mxu0 0.0
  %506 = vmatpush2.msra.mxu0 0.0
  %507 = vmatprep.subr.mxu0 0.0
  %508 = vmatpush2.msra.mxu0 0.0
  %509 = vmatprep.subr.mxu0 0.0
  %510 = vmatpush2.msra.mxu0 0.0
  %511 = vmatprep.subr.mxu0 0.0
  %512 = vmatpush2.msra.mxu0 0.0
  %513 = vmatprep.subr.mxu0 0.0
  %514 = vmatpush2.msra.mxu0 0.0
  %515 = vmatprep.subr.mxu0 0.0
  %516 = vmatpush2.msra.mxu0 0.0
  %517 = vmatprep.subr.mxu0 0.0
  %518 = vmatpush2.msra.mxu0 0.0
  %519 = vmatprep.subr.mxu0 0.0
  %520 = vmatpush2.msra.mxu0 0.0
  %521 = vmatprep.subr.mxu0 0.0
  %522 = vmatpush2.msra.mxu0 0.0
  %523 = vmatprep.subr.mxu0 0.0
  %524 = vmatpush2.msra.mxu0 0.0
  %525 = vmatprep.subr.mxu0 0.0
  %526 = vmatpush2.msra.mxu0 0.0
  %527 = vmatprep.subr.mxu0 0.0
  %528 = vmatpush2.msra.mxu0 0.0
  %529 = vmatprep.mubr.f32.mxu0 0.0
  %530 = vmatmul.mubr.f32.gmra.mxu0 %v463
  %v531 = vpop.f32.mrf.mxu0
  %v532 = vadd.f32 0.0, %v531
  %v533 = vpop.f32.mrf.mxu0
  %534 = vdwg.mxu0
  %v535 = vadd.f32 %v318, %v532
  %v536 = vmul.f32 %v535, %v358
  %v537 = vxor.u32 %v536, 2147483648
  %v538 = vmul.f32 %v537, 1.442695
  %v539 = vpow.pop %v538
  %v540 = vadd.f32 %v539, 1.0
  %v541 = vrcp.pop %v540
  %v542 = vmul.f32 1.0, %v541
  %v543 = vmul.f32 %v542, %v358
  %v544 = vadd.f32 %v543, %v359
  %v545 = vmul.f32 %v544, %v453
  %547 = vrot.lane.b32.xlu0 %v544, 64
  %v548 = vpop.permute.xlu0 %547
  %v550 = vmul.f32 %v544, %v548
  %552 = vrot.lane.b32.xlu0 %v550, 32
  %v553 = vpop.permute.xlu0 %552
  %v555 = vadd.f32 %v545, %v553
  %v556 = vtanh.pop %v555
  %558 = vrot.lane.b32.xlu0 %v556, 64
  %v559 = vpop.permute.xlu0 %558
  %v561 = vmul.f32 %v544, %v559
  %563 = vrot.lane.b32.xlu0 %v561, 32
  %v564 = vpop.permute.xlu0 %563
  %v565 = vsel %vm82, %v564, 0
  %567 = vmatprep.subr.mxu0 0.0
  %568 = vmatpush1.msra.mxu0 0.0
  %569 = vmatprep.subr.mxu0 0.0
  %570 = vmatpush1.msra.mxu0 0.0
  %571 = vmatprep.subr.mxu0 0.0
  %572 = vmatpush1.msra.mxu0 0.0
  %573 = vmatprep.subr.mxu0 0.0
  %574 = vmatpush1.msra.mxu0 0.0
  %575 = vmatprep.subr.mxu0 0.0
  %576 = vmatpush1.msra.mxu0 0.0
  %577 = vmatprep.subr.mxu0 0.0
  %578 = vmatpush1.msra.mxu0 0.0
  %579 = vmatprep.subr.mxu0 0.0
  %580 = vmatpush1.msra.mxu0 0.0
  %581 = vmatprep.subr.mxu0 0.0
  %582 = vmatpush1.msra.mxu0 0.0
  %583 = vmatprep.subr.mxu0 0.0
  %584 = vmatpush1.msra.mxu0 0.0
  %585 = vmatprep.subr.mxu0 0.0
  %586 = vmatpush1.msra.mxu0 0.0
  %587 = vmatprep.subr.mxu0 0.0
  %588 = vmatpush1.msra.mxu0 0.0
  %589 = vmatprep.subr.mxu0 0.0
  %590 = vmatpush1.msra.mxu0 0.0
  %591 = vmatprep.subr.mxu0 0.0
  %592 = vmatpush1.msra.mxu0 %v354
  %593 = vmatprep.subr.mxu0 0.0
  %594 = vmatpush1.msra.mxu0 %v353
  %595 = vmatprep.subr.mxu0 0.0
  %596 = vmatpush1.msra.mxu0 %v352
  %597 = vmatprep.subr.mxu0 0.0
  %598 = vmatpush1.msra.mxu0 %v351
  %599 = vmatprep.subr.mxu0 0.0
  %600 = vmatpush2.msra.mxu0 0.0
  %601 = vmatprep.subr.mxu0 0.0
  %602 = vmatpush2.msra.mxu0 0.0
  %603 = vmatprep.subr.mxu0 0.0
  %604 = vmatpush2.msra.mxu0 0.0
  %605 = vmatprep.subr.mxu0 0.0
  %606 = vmatpush2.msra.mxu0 0.0
  %607 = vmatprep.subr.mxu0 0.0
  %608 = vmatpush2.msra.mxu0 0.0
  %609 = vmatprep.subr.mxu0 0.0
  %610 = vmatpush2.msra.mxu0 0.0
  %611 = vmatprep.subr.mxu0 0.0
  %612 = vmatpush2.msra.mxu0 0.0
  %613 = vmatprep.subr.mxu0 0.0
  %614 = vmatpush2.msra.mxu0 0.0
  %615 = vmatprep.subr.mxu0 0.0
  %616 = vmatpush2.msra.mxu0 0.0
  %617 = vmatprep.subr.mxu0 0.0
  %618 = vmatpush2.msra.mxu0 0.0
  %619 = vmatprep.subr.mxu0 0.0
  %620 = vmatpush2.msra.mxu0 0.0
  %621 = vmatprep.subr.mxu0 0.0
  %622 = vmatpush2.msra.mxu0 0.0
  %623 = vmatprep.subr.mxu0 0.0
  %624 = vmatpush2.msra.mxu0 0.0
  %625 = vmatprep.subr.mxu0 0.0
  %626 = vmatpush2.msra.mxu0 0.0
  %627 = vmatprep.subr.mxu0 0.0
  %628 = vmatpush2.msra.mxu0 0.0
  %629 = vmatprep.subr.mxu0 0.0
  %630 = vmatpush2.msra.mxu0 0.0
  %631 = vmatprep.mubr.f32.mxu0 0.0
  %632 = vmatmul.mubr.f32.gmra.mxu0 %v565
  %v633 = vpop.f32.mrf.mxu0
  %v634 = vadd.f32 0.0, %v633
  %v635 = vpop.f32.mrf.mxu0
  %636 = vdwg.mxu0
  %v637 = vadd.f32 %v323, %v634
  %v638 = vmul.f32 %v637, %v358
  %v639 = vxor.u32 %v638, 2147483648
  %v640 = vmul.f32 %v639, 1.442695
  %v641 = vpow.pop %v640
  %v642 = vadd.f32 %v641, 1.0
  %v643 = vrcp.pop %v642
  %v644 = vmul.f32 1.0, %v643
  %v645 = vmul.f32 %v644, %v358
  %v646 = vadd.f32 %v645, %v359
  %v647 = vmul.f32 %v646, %v555
  %649 = vrot.lane.b32.xlu0 %v646, 64
  %v650 = vpop.permute.xlu0 %649
  %v652 = vmul.f32 %v646, %v650
  %654 = vrot.lane.b32.xlu0 %v652, 32
  %v655 = vpop.permute.xlu0 %654
  %v657 = vadd.f32 %v647, %v655
  %v658 = vtanh.pop %v657
  %660 = vrot.lane.b32.xlu0 %v658, 64
  %v661 = vpop.permute.xlu0 %660
  %v663 = vmul.f32 %v646, %v661
  %665 = vrot.lane.b32.xlu0 %v663, 32
  %v666 = vpop.permute.xlu0 %665
  %v667 = vsel %vm82, %v666, 0
  %669 = vmatprep.subr.mxu0 0.0
  %670 = vmatpush1.msra.mxu0 0.0
  %671 = vmatprep.subr.mxu0 0.0
  %672 = vmatpush1.msra.mxu0 0.0
  %673 = vmatprep.subr.mxu0 0.0
  %674 = vmatpush1.msra.mxu0 0.0
  %675 = vmatprep.subr.mxu0 0.0
  %676 = vmatpush1.msra.mxu0 0.0
  %677 = vmatprep.subr.mxu0 0.0
  %678 = vmatpush1.msra.mxu0 0.0
  %679 = vmatprep.subr.mxu0 0.0
  %680 = vmatpush1.msra.mxu0 0.0
  %681 = vmatprep.subr.mxu0 0.0
  %682 = vmatpush1.msra.mxu0 0.0
  %683 = vmatprep.subr.mxu0 0.0
  %684 = vmatpush1.msra.mxu0 0.0
  %685 = vmatprep.subr.mxu0 0.0
  %686 = vmatpush1.msra.mxu0 0.0
  %687 = vmatprep.subr.mxu0 0.0
  %688 = vmatpush1.msra.mxu0 0.0
  %689 = vmatprep.subr.mxu0 0.0
  %690 = vmatpush1.msra.mxu0 0.0
  %691 = vmatprep.subr.mxu0 0.0
  %692 = vmatpush1.msra.mxu0 0.0
  %693 = vmatprep.subr.mxu0 0.0
  %694 = vmatpush1.msra.mxu0 %v354
  %695 = vmatprep.subr.mxu0 0.0
  %696 = vmatpush1.msra.mxu0 %v353
  %697 = vmatprep.subr.mxu0 0.0
  %698 = vmatpush1.msra.mxu0 %v352
  %699 = vmatprep.subr.mxu0 0.0
  %700 = vmatpush1.msra.mxu0 %v351
  %701 = vmatprep.subr.mxu0 0.0
  %702 = vmatpush2.msra.mxu0 0.0
  %703 = vmatprep.subr.mxu0 0.0
  %704 = vmatpush2.msra.mxu0 0.0
  %705 = vmatprep.subr.mxu0 0.0
  %706 = vmatpush2.msra.mxu0 0.0
  %707 = vmatprep.subr.mxu0 0.0
  %708 = vmatpush2.msra.mxu0 0.0
  %709 = vmatprep.subr.mxu0 0.0
  %710 = vmatpush2.msra.mxu0 0.0
  %711 = vmatprep.subr.mxu0 0.0
  %712 = vmatpush2.msra.mxu0 0.0
  %713 = vmatprep.subr.mxu0 0.0
  %714 = vmatpush2.msra.mxu0 0.0
  %715 = vmatprep.subr.mxu0 0.0
  %716 = vmatpush2.msra.mxu0 0.0
  %717 = vmatprep.subr.mxu0 0.0
  %718 = vmatpush2.msra.mxu0 0.0
  %719 = vmatprep.subr.mxu0 0.0
  %720 = vmatpush2.msra.mxu0 0.0
  %721 = vmatprep.subr.mxu0 0.0
  %722 = vmatpush2.msra.mxu0 0.0
  %723 = vmatprep.subr.mxu0 0.0
  %724 = vmatpush2.msra.mxu0 0.0
  %725 = vmatprep.subr.mxu0 0.0
  %726 = vmatpush2.msra.mxu0 0.0
  %727 = vmatprep.subr.mxu0 0.0
  %728 = vmatpush2.msra.mxu0 0.0
  %729 = vmatprep.subr.mxu0 0.0
  %730 = vmatpush2.msra.mxu0 0.0
  %731 = vmatprep.subr.mxu0 0.0
  %732 = vmatpush2.msra.mxu0 0.0
  %733 = vmatprep.mubr.f32.mxu0 0.0
  %734 = vmatmul.mubr.f32.gmra.mxu0 %v667
  %v735 = vpop.f32.mrf.mxu0
  %v736 = vadd.f32 0.0, %v735
  %v737 = vpop.f32.mrf.mxu0
  %738 = vdwg.mxu0
  %v739 = vadd.f32 %v328, %v736
  %v740 = vmul.f32 %v739, %v358
  %v741 = vxor.u32 %v740, 2147483648
  %v742 = vmul.f32 %v741, 1.442695
  %v743 = vpow.pop %v742
  %v744 = vadd.f32 %v743, 1.0
  %v745 = vrcp.pop %v744
  %v746 = vmul.f32 1.0, %v745
  %v747 = vmul.f32 %v746, %v358
  %v748 = vadd.f32 %v747, %v359
  %v749 = vmul.f32 %v748, %v657
  %751 = vrot.lane.b32.xlu0 %v748, 64
  %v752 = vpop.permute.xlu0 %751
  %v754 = vmul.f32 %v748, %v752
  %756 = vrot.lane.b32.xlu0 %v754, 32
  %v757 = vpop.permute.xlu0 %756
  %v759 = vadd.f32 %v749, %v757
  %v760 = vtanh.pop %v759
  %762 = vrot.lane.b32.xlu0 %v760, 64
  %v763 = vpop.permute.xlu0 %762
  %v765 = vmul.f32 %v748, %v763
  %767 = vrot.lane.b32.xlu0 %v765, 32
  %v768 = vpop.permute.xlu0 %767
  %v769 = vsel %vm82, %v768, 0
  %771 = vmatprep.subr.mxu0 0.0
  %772 = vmatpush1.msra.mxu0 0.0
  %773 = vmatprep.subr.mxu0 0.0
  %774 = vmatpush1.msra.mxu0 0.0
  %775 = vmatprep.subr.mxu0 0.0
  %776 = vmatpush1.msra.mxu0 0.0
  %777 = vmatprep.subr.mxu0 0.0
  %778 = vmatpush1.msra.mxu0 0.0
  %779 = vmatprep.subr.mxu0 0.0
  %780 = vmatpush1.msra.mxu0 0.0
  %781 = vmatprep.subr.mxu0 0.0
  %782 = vmatpush1.msra.mxu0 0.0
  %783 = vmatprep.subr.mxu0 0.0
  %784 = vmatpush1.msra.mxu0 0.0
  %785 = vmatprep.subr.mxu0 0.0
  %786 = vmatpush1.msra.mxu0 0.0
  %787 = vmatprep.subr.mxu0 0.0
  %788 = vmatpush1.msra.mxu0 0.0
  %789 = vmatprep.subr.mxu0 0.0
  %790 = vmatpush1.msra.mxu0 0.0
  %791 = vmatprep.subr.mxu0 0.0
  %792 = vmatpush1.msra.mxu0 0.0
  %793 = vmatprep.subr.mxu0 0.0
  %794 = vmatpush1.msra.mxu0 0.0
  %795 = vmatprep.subr.mxu0 0.0
  %796 = vmatpush1.msra.mxu0 %v354
  %797 = vmatprep.subr.mxu0 0.0
  %798 = vmatpush1.msra.mxu0 %v353
  %799 = vmatprep.subr.mxu0 0.0
  %800 = vmatpush1.msra.mxu0 %v352
  %801 = vmatprep.subr.mxu0 0.0
  %802 = vmatpush1.msra.mxu0 %v351
  %803 = vmatprep.subr.mxu0 0.0
  %804 = vmatpush2.msra.mxu0 0.0
  %805 = vmatprep.subr.mxu0 0.0
  %806 = vmatpush2.msra.mxu0 0.0
  %807 = vmatprep.subr.mxu0 0.0
  %808 = vmatpush2.msra.mxu0 0.0
  %809 = vmatprep.subr.mxu0 0.0
  %810 = vmatpush2.msra.mxu0 0.0
  %811 = vmatprep.subr.mxu0 0.0
  %812 = vmatpush2.msra.mxu0 0.0
  %813 = vmatprep.subr.mxu0 0.0
  %814 = vmatpush2.msra.mxu0 0.0
  %815 = vmatprep.subr.mxu0 0.0
  %816 = vmatpush2.msra.mxu0 0.0
  %817 = vmatprep.subr.mxu0 0.0
  %818 = vmatpush2.msra.mxu0 0.0
  %819 = vmatprep.subr.mxu0 0.0
  %820 = vmatpush2.msra.mxu0 0.0
  %821 = vmatprep.subr.mxu0 0.0
  %822 = vmatpush2.msra.mxu0 0.0
  %823 = vmatprep.subr.mxu0 0.0
  %824 = vmatpush2.msra.mxu0 0.0
  %825 = vmatprep.subr.mxu0 0.0
  %826 = vmatpush2.msra.mxu0 0.0
  %827 = vmatprep.subr.mxu0 0.0
  %828 = vmatpush2.msra.mxu0 0.0
  %829 = vmatprep.subr.mxu0 0.0
  %830 = vmatpush2.msra.mxu0 0.0
  %831 = vmatprep.subr.mxu0 0.0
  %832 = vmatpush2.msra.mxu0 0.0
  %833 = vmatprep.subr.mxu0 0.0
  %834 = vmatpush2.msra.mxu0 0.0
  %835 = vmatprep.mubr.f32.mxu0 0.0
  %836 = vmatmul.mubr.f32.gmra.mxu0 %v769
  %v837 = vpop.f32.mrf.mxu0
  %v838 = vadd.f32 0.0, %v837
  %v839 = vpop.f32.mrf.mxu0
  %840 = vdwg.mxu0
  %v841 = vadd.f32 %v333, %v838
  %v842 = vmul.f32 %v841, %v358
  %v843 = vxor.u32 %v842, 2147483648
  %v844 = vmul.f32 %v843, 1.442695
  %v845 = vpow.pop %v844
  %v846 = vadd.f32 %v845, 1.0
  %v847 = vrcp.pop %v846
  %v848 = vmul.f32 1.0, %v847
  %v849 = vmul.f32 %v848, %v358
  %v850 = vadd.f32 %v849, %v359
  %v851 = vmul.f32 %v850, %v759
  %853 = vrot.lane.b32.xlu0 %v850, 64
  %v854 = vpop.permute.xlu0 %853
  %v856 = vmul.f32 %v850, %v854
  %858 = vrot.lane.b32.xlu0 %v856, 32
  %v859 = vpop.permute.xlu0 %858
  %v861 = vadd.f32 %v851, %v859
  %v862 = vtanh.pop %v861
  %864 = vrot.lane.b32.xlu0 %v862, 64
  %v865 = vpop.permute.xlu0 %864
  %v867 = vmul.f32 %v850, %v865
  %869 = vrot.lane.b32.xlu0 %v867, 32
  %v870 = vpop.permute.xlu0 %869
  %v871 = vsel %vm82, %v870, 0
  %873 = vmatprep.subr.mxu0 0.0
  %874 = vmatpush1.msra.mxu0 0.0
  %875 = vmatprep.subr.mxu0 0.0
  %876 = vmatpush1.msra.mxu0 0.0
  %877 = vmatprep.subr.mxu0 0.0
  %878 = vmatpush1.msra.mxu0 0.0
  %879 = vmatprep.subr.mxu0 0.0
  %880 = vmatpush1.msra.mxu0 0.0
  %881 = vmatprep.subr.mxu0 0.0
  %882 = vmatpush1.msra.mxu0 0.0
  %883 = vmatprep.subr.mxu0 0.0
  %884 = vmatpush1.msra.mxu0 0.0
  %885 = vmatprep.subr.mxu0 0.0
  %886 = vmatpush1.msra.mxu0 0.0
  %887 = vmatprep.subr.mxu0 0.0
  %888 = vmatpush1.msra.mxu0 0.0
  %889 = vmatprep.subr.mxu0 0.0
  %890 = vmatpush1.msra.mxu0 0.0
  %891 = vmatprep.subr.mxu0 0.0
  %892 = vmatpush1.msra.mxu0 0.0
  %893 = vmatprep.subr.mxu0 0.0
  %894 = vmatpush1.msra.mxu0 0.0
  %895 = vmatprep.subr.mxu0 0.0
  %896 = vmatpush1.msra.mxu0 0.0
  %897 = vmatprep.subr.mxu0 0.0
  %898 = vmatpush1.msra.mxu0 %v354
  %899 = vmatprep.subr.mxu0 0.0
  %900 = vmatpush1.msra.mxu0 %v353
  %901 = vmatprep.subr.mxu0 0.0
  %902 = vmatpush1.msra.mxu0 %v352
  %903 = vmatprep.subr.mxu0 0.0
  %904 = vmatpush1.msra.mxu0 %v351
  %905 = vmatprep.subr.mxu0 0.0
  %906 = vmatpush2.msra.mxu0 0.0
  %907 = vmatprep.subr.mxu0 0.0
  %908 = vmatpush2.msra.mxu0 0.0
  %909 = vmatprep.subr.mxu0 0.0
  %910 = vmatpush2.msra.mxu0 0.0
  %911 = vmatprep.subr.mxu0 0.0
  %912 = vmatpush2.msra.mxu0 0.0
  %913 = vmatprep.subr.mxu0 0.0
  %914 = vmatpush2.msra.mxu0 0.0
  %915 = vmatprep.subr.mxu0 0.0
  %916 = vmatpush2.msra.mxu0 0.0
  %917 = vmatprep.subr.mxu0 0.0
  %918 = vmatpush2.msra.mxu0 0.0
  %919 = vmatprep.subr.mxu0 0.0
  %920 = vmatpush2.msra.mxu0 0.0
  %921 = vmatprep.subr.mxu0 0.0
  %922 = vmatpush2.msra.mxu0 0.0
  %923 = vmatprep.subr.mxu0 0.0
  %924 = vmatpush2.msra.mxu0 0.0
  %925 = vmatprep.subr.mxu0 0.0
  %926 = vmatpush2.msra.mxu0 0.0
  %927 = vmatprep.subr.mxu0 0.0
  %928 = vmatpush2.msra.mxu0 0.0
  %929 = vmatprep.subr.mxu0 0.0
  %930 = vmatpush2.msra.mxu0 0.0
  %931 = vmatprep.subr.mxu0 0.0
  %932 = vmatpush2.msra.mxu0 0.0
  %933 = vmatprep.subr.mxu0 0.0
  %934 = vmatpush2.msra.mxu0 0.0
  %935 = vmatprep.subr.mxu0 0.0
  %936 = vmatpush2.msra.mxu0 0.0
  %937 = vmatprep.mubr.f32.mxu0 0.0
  %938 = vmatmul.mubr.f32.gmra.mxu0 %v871
  %v939 = vpop.f32.mrf.mxu0
  %v940 = vadd.f32 0.0, %v939
  %v941 = vpop.f32.mrf.mxu0
  %942 = vdwg.mxu0
  %v943 = vadd.f32 %v338, %v940
  %v944 = vmul.f32 %v943, %v358
  %v945 = vxor.u32 %v944, 2147483648
  %v946 = vmul.f32 %v945, 1.442695
  %v947 = vpow.pop %v946
  %v948 = vadd.f32 %v947, 1.0
  %v949 = vrcp.pop %v948
  %v950 = vmul.f32 1.0, %v949
  %v951 = vmul.f32 %v950, %v358
  %v952 = vadd.f32 %v951, %v359
  %v953 = vmul.f32 %v952, %v861
  %955 = vrot.lane.b32.xlu0 %v952, 64
  %v956 = vpop.permute.xlu0 %955
  %v958 = vmul.f32 %v952, %v956
  %960 = vrot.lane.b32.xlu0 %v958, 32
  %v961 = vpop.permute.xlu0 %960
  %v963 = vadd.f32 %v953, %v961
  %v964 = vtanh.pop %v963
  %966 = vrot.lane.b32.xlu0 %v964, 64
  %v967 = vpop.permute.xlu0 %966
  %v969 = vmul.f32 %v952, %v967
  %971 = vrot.lane.b32.xlu0 %v969, 32
  %v972 = vpop.permute.xlu0 %971
  %v973 = vsel %vm82, %v972, 0
  %975 = vmatprep.subr.mxu0 0.0
  %976 = vmatpush1.msra.mxu0 0.0
  %977 = vmatprep.subr.mxu0 0.0
  %978 = vmatpush1.msra.mxu0 0.0
  %979 = vmatprep.subr.mxu0 0.0
  %980 = vmatpush1.msra.mxu0 0.0
  %981 = vmatprep.subr.mxu0 0.0
  %982 = vmatpush1.msra.mxu0 0.0
  %983 = vmatprep.subr.mxu0 0.0
  %984 = vmatpush1.msra.mxu0 0.0
  %985 = vmatprep.subr.mxu0 0.0
  %986 = vmatpush1.msra.mxu0 0.0
  %987 = vmatprep.subr.mxu0 0.0
  %988 = vmatpush1.msra.mxu0 0.0
  %989 = vmatprep.subr.mxu0 0.0
  %990 = vmatpush1.msra.mxu0 0.0
  %991 = vmatprep.subr.mxu0 0.0
  %992 = vmatpush1.msra.mxu0 0.0
  %993 = vmatprep.subr.mxu0 0.0
  %994 = vmatpush1.msra.mxu0 0.0
  %995 = vmatprep.subr.mxu0 0.0
  %996 = vmatpush1.msra.mxu0 0.0
  %997 = vmatprep.subr.mxu0 0.0
  %998 = vmatpush1.msra.mxu0 0.0
  %999 = vmatprep.subr.mxu0 0.0
  %1000 = vmatpush1.msra.mxu0 %v354
  %1001 = vmatprep.subr.mxu0 0.0
  %1002 = vmatpush1.msra.mxu0 %v353
  %1003 = vmatprep.subr.mxu0 0.0
  %1004 = vmatpush1.msra.mxu0 %v352
  %1005 = vmatprep.subr.mxu0 0.0
  %1006 = vmatpush1.msra.mxu0 %v351
  %1007 = vmatprep.subr.mxu0 0.0
  %1008 = vmatpush2.msra.mxu0 0.0
  %1009 = vmatprep.subr.mxu0 0.0
  %1010 = vmatpush2.msra.mxu0 0.0
  %1011 = vmatprep.subr.mxu0 0.0
  %1012 = vmatpush2.msra.mxu0 0.0
  %1013 = vmatprep.subr.mxu0 0.0
  %1014 = vmatpush2.msra.mxu0 0.0
  %1015 = vmatprep.subr.mxu0 0.0
  %1016 = vmatpush2.msra.mxu0 0.0
  %1017 = vmatprep.subr.mxu0 0.0
  %1018 = vmatpush2.msra.mxu0 0.0
  %1019 = vmatprep.subr.mxu0 0.0
  %1020 = vmatpush2.msra.mxu0 0.0
  %1021 = vmatprep.subr.mxu0 0.0
  %1022 = vmatpush2.msra.mxu0 0.0
  %1023 = vmatprep.subr.mxu0 0.0
  %1024 = vmatpush2.msra.mxu0 0.0
  %1025 = vmatprep.subr.mxu0 0.0
  %1026 = vmatpush2.msra.mxu0 0.0
  %1027 = vmatprep.subr.mxu0 0.0
  %1028 = vmatpush2.msra.mxu0 0.0
  %1029 = vmatprep.subr.mxu0 0.0
  %1030 = vmatpush2.msra.mxu0 0.0
  %1031 = vmatprep.subr.mxu0 0.0
  %1032 = vmatpush2.msra.mxu0 0.0
  %1033 = vmatprep.subr.mxu0 0.0
  %1034 = vmatpush2.msra.mxu0 0.0
  %1035 = vmatprep.subr.mxu0 0.0
  %1036 = vmatpush2.msra.mxu0 0.0
  %1037 = vmatprep.subr.mxu0 0.0
  %1038 = vmatpush2.msra.mxu0 0.0
  %1039 = vmatprep.mubr.f32.mxu0 0.0
  %1040 = vmatmul.mubr.f32.gmra.mxu0 %v973
  %v1041 = vpop.f32.mrf.mxu0
  %v1042 = vadd.f32 0.0, %v1041
  %v1043 = vpop.f32.mrf.mxu0
  %1044 = vdwg.mxu0
  %v1045 = vadd.f32 %v343, %v1042
  %v1046 = vmul.f32 %v1045, %v358
  %v1047 = vxor.u32 %v1046, 2147483648
  %v1048 = vmul.f32 %v1047, 1.442695
  %v1049 = vpow.pop %v1048
  %v1050 = vadd.f32 %v1049, 1.0
  %v1051 = vrcp.pop %v1050
  %v1052 = vmul.f32 1.0, %v1051
  %v1053 = vmul.f32 %v1052, %v358
  %v1054 = vadd.f32 %v1053, %v359
  %v1055 = vmul.f32 %v1054, %v963
  %1057 = vrot.lane.b32.xlu0 %v1054, 64
  %v1058 = vpop.permute.xlu0 %1057
  %v1060 = vmul.f32 %v1054, %v1058
  %1062 = vrot.lane.b32.xlu0 %v1060, 32
  %v1063 = vpop.permute.xlu0 %1062
  %v1065 = vadd.f32 %v1055, %v1063
  %v1066 = vtanh.pop %v1065
  %1068 = vrot.lane.b32.xlu0 %v1066, 64
  %v1069 = vpop.permute.xlu0 %1068
  %v1071 = vmul.f32 %v1054, %v1069
  %1073 = vrot.lane.b32.xlu0 %v1071, 32
  %v1074 = vpop.permute.xlu0 %1073
  %v1075 = vsel %vm82, %v1074, 0
  %1077 = vmatprep.subr.mxu0 0.0
  %1078 = vmatpush1.msra.mxu0 0.0
  %1079 = vmatprep.subr.mxu0 0.0
  %1080 = vmatpush1.msra.mxu0 0.0
  %1081 = vmatprep.subr.mxu0 0.0
  %1082 = vmatpush1.msra.mxu0 0.0
  %1083 = vmatprep.subr.mxu0 0.0
  %1084 = vmatpush1.msra.mxu0 0.0
  %1085 = vmatprep.subr.mxu0 0.0
  %1086 = vmatpush1.msra.mxu0 0.0
  %1087 = vmatprep.subr.mxu0 0.0
  %1088 = vmatpush1.msra.mxu0 0.0
  %1089 = vmatprep.subr.mxu0 0.0
  %1090 = vmatpush1.msra.mxu0 0.0
  %1091 = vmatprep.subr.mxu0 0.0
  %1092 = vmatpush1.msra.mxu0 0.0
  %1093 = vmatprep.subr.mxu0 0.0
  %1094 = vmatpush1.msra.mxu0 0.0
  %1095 = vmatprep.subr.mxu0 0.0
  %1096 = vmatpush1.msra.mxu0 0.0
  %1097 = vmatprep.subr.mxu0 0.0
  %1098 = vmatpush1.msra.mxu0 0.0
  %1099 = vmatprep.subr.mxu0 0.0
  %1100 = vmatpush1.msra.mxu0 0.0
  %1101 = vmatprep.subr.mxu0 0.0
  %1102 = vmatpush1.msra.mxu0 %v354
  %1103 = vmatprep.subr.mxu0 0.0
  %1104 = vmatpush1.msra.mxu0 %v353
  %1105 = vmatprep.subr.mxu0 0.0
  %1106 = vmatpush1.msra.mxu0 %v352
  %1107 = vmatprep.subr.mxu0 0.0
  %1108 = vmatpush1.msra.mxu0 %v351
  %1109 = vmatprep.subr.mxu0 0.0
  %1110 = vmatpush2.msra.mxu0 0.0
  %1111 = vmatprep.subr.mxu0 0.0
  %1112 = vmatpush2.msra.mxu0 0.0
  %1113 = vmatprep.subr.mxu0 0.0
  %1114 = vmatpush2.msra.mxu0 0.0
  %1115 = vmatprep.subr.mxu0 0.0
  %1116 = vmatpush2.msra.mxu0 0.0
  %1117 = vmatprep.subr.mxu0 0.0
  %1118 = vmatpush2.msra.mxu0 0.0
  %1119 = vmatprep.subr.mxu0 0.0
  %1120 = vmatpush2.msra.mxu0 0.0
  %1121 = vmatprep.subr.mxu0 0.0
  %1122 = vmatpush2.msra.mxu0 0.0
  %1123 = vmatprep.subr.mxu0 0.0
  %1124 = vmatpush2.msra.mxu0 0.0
  %1125 = vmatprep.subr.mxu0 0.0
  %1126 = vmatpush2.msra.mxu0 0.0
  %1127 = vmatprep.subr.mxu0 0.0
  %1128 = vmatpush2.msra.mxu0 0.0
  %1129 = vmatprep.subr.mxu0 0.0
  %1130 = vmatpush2.msra.mxu0 0.0
  %1131 = vmatprep.subr.mxu0 0.0
  %1132 = vmatpush2.msra.mxu0 0.0
  %1133 = vmatprep.subr.mxu0 0.0
  %1134 = vmatpush2.msra.mxu0 0.0
  %1135 = vmatprep.subr.mxu0 0.0
  %1136 = vmatpush2.msra.mxu0 0.0
  %1137 = vmatprep.subr.mxu0 0.0
  %1138 = vmatpush2.msra.mxu0 0.0
  %1139 = vmatprep.subr.mxu0 0.0
  %1140 = vmatpush2.msra.mxu0 0.0
  %1141 = vmatprep.mubr.f32.mxu0 0.0
  %1142 = vmatmul.mubr.f32.gmra.mxu0 %v1075
  %v1143 = vpop.f32.mrf.mxu0
  %v1144 = vadd.f32 0.0, %v1143
  %v1145 = vpop.f32.mrf.mxu0
  %1146 = vdwg.mxu0
  %v1147 = vadd.f32 %v348, %v1144
  %v1148 = vmul.f32 %v1147, %v358
  %v1149 = vxor.u32 %v1148, 2147483648
  %v1150 = vmul.f32 %v1149, 1.442695
  %v1151 = vpow.pop %v1150
  %v1152 = vadd.f32 %v1151, 1.0
  %v1153 = vrcp.pop %v1152
  %v1154 = vmul.f32 1.0, %v1153
  %v1155 = vmul.f32 %v1154, %v358
  %v1156 = vadd.f32 %v1155, %v359
  %v1157 = vmul.f32 %v1156, %v1065
  %1159 = vrot.lane.b32.xlu0 %v1156, 64
  %v1160 = vpop.permute.xlu0 %1159
  %v1162 = vmul.f32 %v1156, %v1160
  %1164 = vrot.lane.b32.xlu0 %v1162, 32
  %v1165 = vpop.permute.xlu0 %1164
  %v1167 = vadd.f32 %v1157, %v1165
  %v1168 = vtanh.pop %v1167
  %1170 = vrot.lane.b32.xlu0 %v1168, 64
  %v1171 = vpop.permute.xlu0 %1170
  %v1173 = vmul.f32 %v1156, %v1171
  %1175 = vrot.lane.b32.xlu0 %v561, 64
  %v1176 = vpop.permute.xlu0 %1175
  %1178 = vrot.lane.b32.xlu0 %v663, 96
  %v1179 = vpop.permute.xlu0 %1178
  %1182 = vrot.lane.b32.xlu0 %v969, 64
  %v1183 = vpop.permute.xlu0 %1182
  %1185 = vrot.lane.b32.xlu0 %v1071, 96
  %v1186 = vpop.permute.xlu0 %1185
  %1189 = vrot.lane.b32.xlu0 %v1167, 96
  %v1190 = vpop.permute.xlu0 %1189
  %v1192 = vsel %vm82, %v462, %v1176
  %vm1193 = vcmask 523264
  %v1194 = vsel %vm1193, %v1192, %v1179
  %vm1195 = vcmask 785408
  %v1196 = vsel %vm1195, %v1194, %v765
  %v1197 = vsel %vm82, %v870, %v1183
  %v1198 = vsel %vm1193, %v1197, %v1186
  %v1199 = vsel %vm1195, %v1198, %v1173
  %1200 = vst [vmem:[%s5] sm:$0xff] %v1196
  %1201 = vst [vmem:[%s5 + $0x8] sm:$0xff] %v1199
  %1202 = vst.msk [vmem:[%s5 + $0x10] sm:$0xff] %vm82, %v1190
  // Predicated region
  $region22: #{encoder_attention_forward.1} parent=0 // pred_check
    _
  $region23: #{encoder_attention_forward.1} parent=0 // pred_check_branch
    %1204 = sbr.rel (0) target = $region25
  $region24: #{encoder_attention_forward.1} parent=0 // pred_region
    _
  $region25: #{encoder_attention_forward.1} parent=0 // pred_fallthru
    _
  // Predicated region
  $region26: #{encoder_attention_forward.1} parent=0 // pred_check
    _
  $region27: #{encoder_attention_forward.1} parent=0 // pred_check_branch
    %1206 = sbr.rel (0) target = $region29
  $region28: #{encoder_attention_forward.1} parent=0 // pred_region
    _
  $region29: #{encoder_attention_forward.1} parent=0 // pred_fallthru
    _

</llo_original>
